<compile_context>
chip_gen: v7x
topology: tpu7x:2x2x1
jax: 0.10.0
libtpu: 0.0.40
codegen_flags: <defaults>
</compile_context>

<pallas_src>
import jax
import jax.numpy as jnp
from jax.experimental import pallas as pl
from jax.experimental.pallas import tpu as pltpu


# ----------------------------- kernel body ---------------------------------

def _linear_kernel(x_ref, w_ref, b_ref, o_ref):
    # x_ref: (TM, C_in)   w_ref: (C_in, C_out) bf16   b_ref: (1, C_out) f32
    x = x_ref[...].astype(jnp.bfloat16)            # no-op if x is already bf16
    acc = jnp.dot(x, w_ref[...], preferred_element_type=jnp.float32)
    o_ref[...] = (acc + b_ref[...]).astype(o_ref.dtype)


# ----------------------------- helpers --------------------------------------

def _round_up(x, m):
    return (x + m - 1) // m * m


def _vmem_budget_bytes():
    """Generation-aware VMEM budget (3/8 of physical VMEM)."""
    try:
        cap = pltpu.get_tpu_info().vmem_capacity_bytes
    except Exception:
        cap = 128 * 1024 * 1024
    # v5e/v6e (128 MiB) -> 48 MiB, v7x (64 MiB) -> 24 MiB.
    return int(cap) * 3 // 8


def _choose_tm(n, c_in, c_out, io_bytes, budget, tm_max=2048):
    """Largest row tile fitting the VMEM budget (dtype-aware sublane granule)."""
    # Sublane granule: 8 for 4-byte, 16 for 2-byte, 32 for 1-byte dtypes.
    granule = 8 * max(1, 4 // max(1, io_bytes))
    tm = min(tm_max, _round_up(max(n, 1), granule))

    def vmem_bytes(t):
        # Pallas double-buffers EVERY pipelined operand, including the
        # constant-index weight/bias blocks, so count them twice.
        return (2 * t * c_in * io_bytes          # x tiles
                + 2 * t * c_out * io_bytes       # out tiles
                + 2 * c_in * c_out * 2           # bf16 weight
                + 2 * c_out * 4)                 # f32 bias

    while tm > granule and vmem_bytes(tm) > budget:
        tm = max(granule, _round_up(tm // 2, granule))

    # Keep >=2 row-grid steps when N is large enough so the "parallel" row
    # axis can shard across both TensorCores on v7x (no effect on 1-TC chips).
    if n >= 512:
        tm = min(tm, max(256, _round_up(-(-n // 2), 256)))
    return tm


def linear_pallas(x, w_t_bf16, b_f32):
    """out = x @ W.T + b.  w_t_bf16: (C_in, C_out) bf16, b_f32: (1, C_out)."""
    n, c_in = x.shape
    c_out = w_t_bf16.shape[1]
    io_bytes = jnp.dtype(x.dtype).itemsize       # output dtype follows x
    budget = _vmem_budget_bytes()
    tm = _choose_tm(n, c_in, c_out, io_bytes, budget)

    cost = pl.CostEstimate(
        flops=2 * n * c_in * c_out,
        transcendentals=0,
        bytes_accessed=(n * c_in * io_bytes      # x
                        + c_in * c_out * 2       # weight (bf16)
                        + c_out * 4              # bias
                        + n * c_out * io_bytes)) # out

    return pl.pallas_call(
        _linear_kernel,
        out_shape=jax.ShapeDtypeStruct((n, c_out), x.dtype),
        grid=(pl.cdiv(n, tm),),
        in_specs=[
            pl.BlockSpec((tm, c_in), lambda i: (i, 0)),      # row tiles of x
            pl.BlockSpec((c_in, c_out), lambda i: (0, 0)),   # resident W^T
            pl.BlockSpec((1, c_out), lambda i: (0, 0)),      # resident bias
        ],
        out_specs=pl.BlockSpec((tm, c_out), lambda i: (i, 0)),  # true width
        compiler_params=pltpu.CompilerParams(
            dimension_semantics=("parallel",),
            vmem_limit_bytes=budget),
        cost_estimate=cost,
    )(x, w_t_bf16, b_f32)


# ----------------------------- module port ----------------------------------

class NodeDecoderPallas:
    """JAX/Pallas port of NodeDecoder (node_type='tweet'/'user' and None)."""

    _TYPES = ("tweet", "user")

    def __init__(self, in_channels, out_channels, node_type="tweet", key=None):
        self.node_type = node_type
        self.in_channels = in_channels
        self.out_channels = out_channels
        if key is None:
            key = jax.random.PRNGKey(0)

        bound = 1.0 / (in_channels ** 0.5)              # ~torch Linear init

        def make_params(k):
            kw, kb = jax.random.split(k)
            w = jax.random.uniform(kw, (out_channels, in_channels),
                                   jnp.float32, -bound, bound)
            b = jax.random.uniform(kb, (out_channels,),
                                   jnp.float32, -bound, bound)
            # Kernel-ready copies made ONCE: pre-transposed bf16 weight,
            # (1, C_out) f32 bias.  No padding — kernel writes true width.
            w_t = w.T.astype(jnp.bfloat16)
            b_r = b.reshape(1, out_channels)
            return (w, b), (w_t, b_r)

        self.master_params = {}
        self.kernel_params = {}
        types = self._TYPES if node_type is None else (node_type,)
        for i, nt in enumerate(types):
            master, kern = make_params(jax.random.fold_in(key, i))
            self.master_params[nt] = master
            self.kernel_params[nt] = kern

    def __call__(self, x_dict):
        if self.node_type is None:
            out = dict(x_dict)
            for nt, x in x_dict.items():
                if nt in self._TYPES:
                    w_t, b = self.kernel_params[nt]
                    out[nt] = linear_pallas(x, w_t, b)
            return out
        else:
            x = x_dict[self.node_type]
            w_t, b = self.kernel_params[self.node_type]
            return linear_pallas(x, w_t, b)


# ----------------------------- demo / check ---------------------------------

if __name__ == "__main__":
    key = jax.random.PRNGKey(0)
    k_x, k_u, k_m1, k_m2 = jax.random.split(key, 4)

    N, C_IN, C_OUT = 64, 32, 16
    x_tweet = jax.random.normal(k_x, (N, C_IN), jnp.float32)
    x_user = jax.random.normal(k_u, (N, C_IN), jnp.float32)
    x_dict = {"tweet": x_tweet, "user": x_user}

    # --- node_type='tweet' (single Linear) ---
    dec = NodeDecoderPallas(C_IN, C_OUT, node_type="tweet", key=k_m1)
    out = jax.block_until_ready(dec(x_dict))
    assert out.shape == (N, C_OUT)

    w32, b32 = dec.master_params["tweet"]
    wk, bk = dec.kernel_params["tweet"]
    # Tight check vs. a bf16-matmul reference (same numerics as the kernel).
    ref_bf16 = jnp.dot(x_tweet.astype(jnp.bfloat16), wk,
                       preferred_element_type=jnp.float32) + bk
    assert jnp.allclose(out, ref_bf16, atol=1e-3, rtol=1e-3)
    # Loose check vs. the f32 master parameters (bf16 MXU rounding).
    assert jnp.allclose(out, x_tweet @ w32.T + b32, atol=5e-2, rtol=5e-2)

    # --- bf16 activations accepted directly (halved input/output HBM bytes) ---
    out_bf16 = jax.block_until_ready(dec({"tweet": x_tweet.astype(jnp.bfloat16)}))
    assert out_bf16.dtype == jnp.bfloat16 and out_bf16.shape == (N, C_OUT)
    assert jnp.allclose(out_bf16.astype(jnp.float32), x_tweet @ w32.T + b32,
                        atol=1e-1, rtol=1e-1)

    # --- node_type=None (one launch per node type, no stack/split copies) ---
    dec2 = NodeDecoderPallas(C_IN, C_OUT, node_type=None, key=k_m2)
    out2 = jax.block_until_ready(dec2(x_dict))
    for nt, x in (("tweet", x_tweet), ("user", x_user)):
        w32, b32 = dec2.master_params[nt]
        assert out2[nt].shape == (N, C_OUT)
        assert jnp.allclose(out2[nt], x @ w32.T + b32, atol=5e-2, rtol=5e-2)

    print("KERNEL_OK")
</pallas_src>

<mosaic_0001>
module attributes {stable_mosaic.version = 11 : i64} {
  func.func @_linear_kernel(%arg0: i32, %arg1: memref<64x32xf32, #tpu.memory_space<vmem>>, %arg2: memref<32x16xbf16, #tpu.memory_space<vmem>>, %arg3: memref<1x16xf32, #tpu.memory_space<vmem>>, %arg4: memref<64x16xf32, #tpu.memory_space<vmem>>) attributes {dimension_semantics = [#tpu.dimension_semantics<parallel>], iteration_bounds = array<i64: 1>, scalar_prefetch = 0 : i64, scratch_operands = 0 : i64, tpu.core_type = #tpu.core_type<tc>, window_params = [{transform_indices = @transform_0, window_bounds = array<i64: 64, 32>}, {pipeline_mode = #tpu.pipeline_mode<synchronous>, transform_indices = @transform_1, window_bounds = array<i64: 32, 16>}, {pipeline_mode = #tpu.pipeline_mode<synchronous>, transform_indices = @transform_2, window_bounds = array<i64: 1, 16>}, {transform_indices = @transform_3, window_bounds = array<i64: 64, 16>}]} {
    %c0 = arith.constant 0 : index
    %c0_0 = arith.constant 0 : index
    %0 = vector.load %arg1[%c0, %c0_0] : memref<64x32xf32, #tpu.memory_space<vmem>>, vector<64x32xf32>
    %1 = arith.truncf %0 : vector<64x32xf32> to vector<64x32xbf16>
    %c0_1 = arith.constant 0 : index
    %c0_2 = arith.constant 0 : index
    %2 = vector.load %arg2[%c0_1, %c0_2] : memref<32x16xbf16, #tpu.memory_space<vmem>>, vector<32x16xbf16>
    %cst = arith.constant dense<0.000000e+00> : vector<64x16xf32>
    %3 = tpu.matmul %1, %2, %cst {dimension_numbers = #tpu.dot_dimension_numbers<[1], [0], [0], [1], [0, 0, 1, 1], [], []>} : vector<64x32xbf16>, vector<32x16xbf16>, vector<64x16xf32> -> vector<64x16xf32>
    %c0_3 = arith.constant 0 : index
    %c0_4 = arith.constant 0 : index
    %4 = vector.load %arg3[%c0_3, %c0_4] : memref<1x16xf32, #tpu.memory_space<vmem>>, vector<1x16xf32>
    %5 = vector.broadcast %4 : vector<1x16xf32> to vector<64x16xf32>
    %6 = arith.addf %3, %5 : vector<64x16xf32>
    %c0_5 = arith.constant 0 : index
    %c0_6 = arith.constant 0 : index
    %7 = vector.load %arg4[%c0_5, %c0_6] : memref<64x16xf32, #tpu.memory_space<vmem>>, vector<64x16xf32>
    tpu.vector_store %arg4[%c0_5, %c0_6], %6 {strides = array<i32>} : memref<64x16xf32, #tpu.memory_space<vmem>>, vector<64x16xf32>,
    return
  }
  func.func @transform_0(%arg0: i32) -> (i32, i32) {
    %c0_i32 = arith.constant 0 : i32
    %c0_i32_0 = arith.constant 0 : i32
    return %arg0, %c0_i32 : i32, i32
  }
  func.func @transform_1(%arg0: i32) -> (i32, i32) {
    %c0_i32 = arith.constant 0 : i32
    %c0_i32_0 = arith.constant 0 : i32
    %c0_i32_1 = arith.constant 0 : i32
    return %c0_i32, %c0_i32_0 : i32, i32
  }
  func.func @transform_2(%arg0: i32) -> (i32, i32) {
    %c0_i32 = arith.constant 0 : i32
    %c0_i32_0 = arith.constant 0 : i32
    %c0_i32_1 = arith.constant 0 : i32
    return %c0_i32, %c0_i32_0 : i32, i32
  }
  func.func @transform_3(%arg0: i32) -> (i32, i32) {
    %c0_i32 = arith.constant 0 : i32
    %c0_i32_0 = arith.constant 0 : i32
    return %arg0, %c0_i32 : i32, i32
  }
}

</mosaic_0001>

<llo_original>
// kernel: tpu_custom_call.1
$region0: #{tpu_custom_call.1}
  #allocation0 [shape = 'u32[]', space=smem, size = 0x4, offset = 0x4, fixed_abs, tag = 'smem constant byte address 0x4 - core index']
  #allocation1 [shape = 'u32[144,128]{1,0:T(1,128)}', space=vmem, size = 0x12000, scoped, tag = 'internal scratch']
  %s0 = inlined_call_operand.vmem [shape: f32[64,32], index: 0, kind: input, shape index: {}]
  %s1 = inlined_call_operand.vmem [shape: bf16[32,16], index: 1, kind: input, shape index: {}]
  %s2 = inlined_call_operand.vmem [shape: f32[1,16], index: 2, kind: input, shape index: {}]
  %s3 = inlined_call_operand.vmem [shape: f32[64,16], index: 3, kind: output, shape index: {}]
  %s4 = sld [smem:[#allocation0]]
  $region22: #{tpu_custom_call.1} parent=0
    _
  %s6 = ssub.s32 1, %s4
  %s7 = scalar_select 0, %s6, %s4
  // Predicated region
  $region2: #{tpu_custom_call.1} parent=0 // pred_check
    _
  $region3: #{tpu_custom_call.1} parent=0 // pred_check_branch
    %9 = sbr.rel (0) target = $region5
  $region4: #{tpu_custom_call.1} parent=0 // pred_region
    _
  $region5: #{tpu_custom_call.1} parent=0 // pred_fallthru
    _
  // Predicated region
  $region6: #{tpu_custom_call.1} parent=0 // pred_check
    _
  $region7: #{tpu_custom_call.1} parent=0 // pred_check_branch
    %11 = sbr.rel (0) target = $region9
  $region8: #{tpu_custom_call.1} parent=0 // pred_region
    _
  $region9: #{tpu_custom_call.1} parent=0 // pred_fallthru
    _
  // Predicated region
  $region10: #{tpu_custom_call.1} parent=0 // pred_check
    _
  $region11: #{tpu_custom_call.1} parent=0 // pred_check_branch
    %13 = sbr.rel (0) target = $region13
  $region12: #{tpu_custom_call.1} parent=0 // pred_region
    _
  $region13: #{tpu_custom_call.1} parent=0 // pred_fallthru
    _
  %v15 = vld [vmem:[%s0] sm:$0xff]
  %v16 = vld [vmem:[%s0 + $0x8] sm:$0xff]
  %v17 = vld [vmem:[%s0 + $0x10] sm:$0xff]
  %v18 = vld [vmem:[%s0 + $0x18] sm:$0xff]
  %v19 = vld [vmem:[%s0 + $0x20] sm:$0xff]
  %v20 = vld [vmem:[%s0 + $0x28] sm:$0xff]
  %v21 = vld [vmem:[%s0 + $0x30] sm:$0xff]
  %v22 = vld [vmem:[%s0 + $0x38] sm:$0xff]
  %v23 = vpack.c.bf16 %v16, %v15
  %v24 = vpack.c.bf16 %v18, %v17
  %v25 = vpack.c.bf16 %v20, %v19
  %v26 = vpack.c.bf16 %v22, %v21
  %v27 = vld [vmem:[%s1] sm:$0xf]
  %v28 = vld [vmem:[%s1 + $0x4] sm:$0xf]
  %v29 = vld [vmem:[%s1 + $0x8] sm:$0xf]
  %v30 = vld [vmem:[%s1 + $0xc] sm:$0xf]
  %v31 = vld [vmem:[%s2] sm:$0x1]
  %v33 = vlaneseq
  %v34 = vshrl.u32 %v33, 7
  %v35 = vsub.s32 0, %v34
  %v36 = vrot.slane %v31, %v35
  %v42 = vunpack.c.l.b16 %v27
  %v43 = vunpack.c.l.b16 %v28
  %v44 = vunpack.c.l.b16 %v29
  %v45 = vunpack.c.l.b16 %v30
  %v46 = vpack.c.b16 %v43, %v42
  %v47 = vpack.c.b16 %v45, %v44
  %vm50 = vcmask 261120
  %v52 = vsel %vm50, %v23, 0
  %v55 = vsel %vm50, %v24, 0
  %v58 = vsel %vm50, %v25, 0
  %v61 = vsel %vm50, %v26, 0
  %63 = vmatprep.subr.bf16.mxu0 0
  %64 = vmatpush1.bf16.msra.mxu0 %v46
  %65 = vmatprep.subr.bf16.mxu0 0
  %66 = vmatpush1.bf16.msra.mxu0 %v47
  %67 = vmatprep.subr.bf16.mxu0 0
  %68 = vmatpush1.bf16.msra.mxu0 0
  %69 = vmatprep.subr.bf16.mxu0 0
  %70 = vmatpush1.bf16.msra.mxu0 0
  %71 = vmatprep.subr.bf16.mxu0 0
  %72 = vmatpush1.bf16.msra.mxu0 0
  %73 = vmatprep.subr.bf16.mxu0 0
  %74 = vmatpush1.bf16.msra.mxu0 0
  %75 = vmatprep.subr.bf16.mxu0 0
  %76 = vmatpush1.bf16.msra.mxu0 0
  %77 = vmatprep.subr.bf16.mxu0 0
  %78 = vmatpush1.bf16.msra.mxu0 0
  %79 = vmatprep.subr.bf16.mxu0 0
  %80 = vmatpush1.bf16.msra.mxu0 0
  %81 = vmatprep.subr.bf16.mxu0 0
  %82 = vmatpush1.bf16.msra.mxu0 0
  %83 = vmatprep.subr.bf16.mxu0 0
  %84 = vmatpush1.bf16.msra.mxu0 0
  %85 = vmatprep.subr.bf16.mxu0 0
  %86 = vmatpush1.bf16.msra.mxu0 0
  %87 = vmatprep.subr.bf16.mxu0 0
  %88 = vmatpush1.bf16.msra.mxu0 0
  %89 = vmatprep.subr.bf16.mxu0 0
  %90 = vmatpush1.bf16.msra.mxu0 0
  %91 = vmatprep.subr.bf16.mxu0 0
  %92 = vmatpush1.bf16.msra.mxu0 0
  %93 = vmatprep.subr.bf16.mxu0 0
  %94 = vmatpush1.bf16.msra.mxu0 0
  %95 = vmatprep.mubr.bf16.mxu0 0
  %96 = vmatmul.mubr.bf16.gmra.mrb[0].mxu0 %v52
  %v97 = vpop.f32.mrb[0].mxu0
  %v98 = vadd.f32 %v36, %v97
  %v99 = vpop.f32.mrb[0].mxu0
  %v100 = vpop.f32.mrb[0].mxu0
  %v101 = vadd.f32 %v36, %v100
  %v102 = vpop.f32.mrb[0].mxu0
  %103 = vmatprep.mubr.bf16.mxu0 0
  %104 = vmatmul.mubr.bf16.gmra.mrb[0].mxu0 %v55
  %v105 = vpop.f32.mrb[0].mxu0
  %v106 = vadd.f32 %v36, %v105
  %v107 = vpop.f32.mrb[0].mxu0
  %v108 = vpop.f32.mrb[0].mxu0
  %v109 = vadd.f32 %v36, %v108
  %v110 = vpop.f32.mrb[0].mxu0
  %111 = vmatprep.mubr.bf16.mxu0 0
  %112 = vmatmul.mubr.bf16.gmra.mrb[0].mxu0 %v58
  %v113 = vpop.f32.mrb[0].mxu0
  %v114 = vadd.f32 %v36, %v113
  %v115 = vpop.f32.mrb[0].mxu0
  %v116 = vpop.f32.mrb[0].mxu0
  %v117 = vadd.f32 %v36, %v116
  %v118 = vpop.f32.mrb[0].mxu0
  %119 = vmatprep.mubr.bf16.mxu0 0
  %120 = vmatmul.mubr.bf16.gmra.mrb[0].mxu0 %v61
  %v121 = vpop.f32.mrb[0].mxu0
  %v122 = vadd.f32 %v36, %v121
  %v123 = vpop.f32.mrb[0].mxu0
  %v124 = vpop.f32.mrb[0].mxu0
  %v125 = vadd.f32 %v36, %v124
  %v126 = vpop.f32.mrb[0].mxu0
  %127 = vdwg.mxu0
  %vm128 = vcmask 130048
  %129 = vst.msk [vmem:[%s3] sm:$0xff] %vm128, %v98
  %130 = vst.msk [vmem:[%s3 + $0x8] sm:$0xff] %vm128, %v101
  %131 = vst.msk [vmem:[%s3 + $0x10] sm:$0xff] %vm128, %v106
  %132 = vst.msk [vmem:[%s3 + $0x18] sm:$0xff] %vm128, %v109
  %133 = vst.msk [vmem:[%s3 + $0x20] sm:$0xff] %vm128, %v114
  %134 = vst.msk [vmem:[%s3 + $0x28] sm:$0xff] %vm128, %v117
  %135 = vst.msk [vmem:[%s3 + $0x30] sm:$0xff] %vm128, %v122
  %136 = vst.msk [vmem:[%s3 + $0x38] sm:$0xff] %vm128, %v125
  // Predicated region
  $region14: #{tpu_custom_call.1} parent=0 // pred_check
    _
  $region15: #{tpu_custom_call.1} parent=0 // pred_check_branch
    %138 = sbr.rel (0) target = $region17
  $region16: #{tpu_custom_call.1} parent=0 // pred_region
    _
  $region17: #{tpu_custom_call.1} parent=0 // pred_fallthru
    _
  // Predicated region
  $region18: #{tpu_custom_call.1} parent=0 // pred_check
    _
  $region19: #{tpu_custom_call.1} parent=0 // pred_check_branch
    %140 = sbr.rel (0) target = $region21
  $region20: #{tpu_custom_call.1} parent=0 // pred_region
    _
  $region21: #{tpu_custom_call.1} parent=0 // pred_fallthru
    _

</llo_original>
